<compile_context>
chip_gen: v5e
topology: v5e:2x2
jax: 0.10.0
libtpu: 0.0.40
codegen_flags: <defaults>
</compile_context>

<pallas_src>
import functools

import jax
import jax.numpy as jnp
from jax import lax
from jax.experimental import pallas as pl
from jax.experimental.pallas import tpu as pltpu


def _head_kernel(x_ref, w_ref, o_ref, *, hp):
    # x_ref: (Bt, T, C); w_ref: (C, 3*Hp); o_ref: (Bt, T, Hp)
    x = x_ref[...]                                   # native dtype
    w = w_ref[...]
    bt, t, c = x.shape

    # Fused QKV projection: one wide matmul with M = Bt*T (fills MXU sublanes),
    # N = 3*Hp (lane-dense).  f32 accumulation, operands kept in input dtype.
    xm = x.reshape(bt * t, c)
    qkv = jnp.dot(xm, w, preferred_element_type=jnp.float32)       # (Bt*T, 3Hp)
    qkv = qkv.reshape(bt, t, 3 * hp).astype(x.dtype)

    k = qkv[:, :, :hp]                               # (Bt, T, Hp)
    q = qkv[:, :, hp:2 * hp]                         # already scaled by C**-0.5
    v = qkv[:, :, 2 * hp:]

    # Attention scores.  Contract the head axis directly -- no materialized
    # transpose.  (The C**-0.5 scale is pre-folded into the Q weight columns.)
    scores = jnp.einsum('bqd,bkd->bqk', q, k,
                        preferred_element_type=jnp.float32)         # (Bt,T,T) f32

    # Causal mask (tril): keep positions where row >= col.  Single 2-D iota
    # comparison, broadcast across the batch block.  Large finite negative
    # instead of -inf (robust if fully-masked rows ever appear).
    row = lax.broadcasted_iota(jnp.int32, (t, t), 0)
    col = lax.broadcasted_iota(jnp.int32, (t, t), 1)
    causal = (row >= col)[None, :, :]                                # (1,T,T)
    scores = jnp.where(causal, scores, jnp.float32(-1e30))

    # Numerically-stable softmax along last dim (f32 on the VPU/EUP).
    m = jnp.max(scores, axis=-1, keepdims=True)
    e = jnp.exp(scores - m)
    denom = jnp.sum(e, axis=-1, keepdims=True)
    weights = e * pl.reciprocal(denom, approx=True)

    out = jnp.einsum('bqk,bkd->bqd', weights.astype(v.dtype), v,
                     preferred_element_type=jnp.float32)             # (Bt,T,Hp)
    o_ref[...] = out.astype(o_ref.dtype)


def head_forward(x, wk, wq, wv, *, max_batch_block=8):
    """x: (B, T, C); wk/wq/wv: (C, H)  ->  (B, T, H)."""
    B, T, C = x.shape
    H = wk.shape[1]

    # Pad the head dim up to a lane-dense multiple of 128 and fuse Q/K/V into
    # a single (C, 3*Hp) weight.  Fold the attention scale into the Q columns
    # (one-time tiny (C,Hp) op, removes the per-step scale on (T,T) scores).
    Hp = max(128, ((H + 127) // 128) * 128)
    pad = Hp - H
    scale = float(C) ** -0.5

    def _pad(w):
        return jnp.pad(w, ((0, 0), (0, pad))) if pad else w

    w_qkv = jnp.concatenate(
        [_pad(wk), _pad(wq * jnp.asarray(scale, wq.dtype)), _pad(wv)],
        axis=1)                                                       # (C, 3*Hp)

    # Largest divisor of B not exceeding max_batch_block -> batch rows per step.
    bt = 1
    for d in range(1, min(B, max_batch_block) + 1):
        if B % d == 0:
            bt = d
    grid = (B // bt,)

    kernel = functools.partial(_head_kernel, hp=Hp)

    out_padded = pl.pallas_call(
        kernel,
        out_shape=jax.ShapeDtypeStruct((B, T, Hp), x.dtype),
        grid_spec=pltpu.PrefetchScalarGridSpec(
            num_scalar_prefetch=0,
            grid=grid,
            in_specs=[
                pl.BlockSpec((bt, T, C), lambda b: (b, 0, 0)),
                pl.BlockSpec((C, 3 * Hp), lambda b: (0, 0)),
            ],
            out_specs=pl.BlockSpec((bt, T, Hp), lambda b: (b, 0, 0)),
        ),
        compiler_params=pltpu.CompilerParams(
            dimension_semantics=("parallel",)),
    )(x, w_qkv)

    return out_padded[:, :, :H]


def reference_forward(x, wk, wq, wv):
    """Pure-JAX reference of the PyTorch forward (eval mode)."""
    B, T, C = x.shape
    k = x @ wk
    q = x @ wq
    v = x @ wv
    scores = jnp.einsum("bth,bsh->bts", q, k) * (C ** -0.5)
    mask = jnp.tril(jnp.ones((T, T), dtype=bool))
    scores = jnp.where(mask[None], scores, -jnp.inf)
    weights = jax.nn.softmax(scores, axis=-1)
    return weights @ v


if __name__ == "__main__":
    # Small shapes consistent with the module (block_size >= T).
    B, T, C, H = 2, 8, 32, 16

    key = jax.random.PRNGKey(0)
    kx, kk, kq, kv = jax.random.split(key, 4)

    x = jax.random.normal(kx, (B, T, C), dtype=jnp.float32)
    bound = 1.0 / (C ** 0.5)
    wk = jax.random.uniform(kk, (C, H), jnp.float32, -bound, bound)
    wq = jax.random.uniform(kq, (C, H), jnp.float32, -bound, bound)
    wv = jax.random.uniform(kv, (C, H), jnp.float32, -bound, bound)

    out = head_forward(x, wk, wq, wv)
    out = jax.block_until_ready(out)

    ref = reference_forward(x, wk, wq, wv)
    assert out.shape == (B, T, H)
    # Tolerance accounts for the EUP approximate reciprocal in the softmax.
    assert jnp.allclose(out, ref, atol=5e-3, rtol=5e-3), "mismatch vs reference"

    print("KERNEL_OK")
</pallas_src>

<mosaic_0001>
module attributes {stable_mosaic.version = 11 : i64} {
  func.func @_head_kernel(%arg0: i32, %arg1: memref<2x8x32xf32, #tpu.memory_space<vmem>>, %arg2: memref<32x384xf32, #tpu.memory_space<vmem>>, %arg3: memref<2x8x128xf32, #tpu.memory_space<vmem>>) attributes {dimension_semantics = [#tpu.dimension_semantics<parallel>], iteration_bounds = array<i64: 1>, scalar_prefetch = 0 : i64, scratch_operands = 0 : i64, tpu.core_type = #tpu.core_type<tc>, window_params = [{transform_indices = @transform_0, window_bounds = array<i64: 2, 8, 32>}, {pipeline_mode = #tpu.pipeline_mode<synchronous>, transform_indices = @transform_1, window_bounds = array<i64: 32, 384>}, {transform_indices = @transform_2, window_bounds = array<i64: 2, 8, 128>}]} {
    %c0 = arith.constant 0 : index
    %c0_0 = arith.constant 0 : index
    %c0_1 = arith.constant 0 : index
    %0 = vector.load %arg1[%c0, %c0_0, %c0_1] : memref<2x8x32xf32, #tpu.memory_space<vmem>>, vector<2x8x32xf32>
    %c0_2 = arith.constant 0 : index
    %c0_3 = arith.constant 0 : index
    %1 = vector.load %arg2[%c0_2, %c0_3] : memref<32x384xf32, #tpu.memory_space<vmem>>, vector<32x384xf32>
    %2 = vector.shape_cast %0 : vector<2x8x32xf32> to vector<16x32xf32>
    %cst = arith.constant dense<0.000000e+00> : vector<16x384xf32>
    %3 = tpu.matmul %2, %1, %cst {dimension_numbers = #tpu.dot_dimension_numbers<[1], [0], [0], [1], [0, 0, 1, 1], [], []>} : vector<16x32xf32>, vector<32x384xf32>, vector<16x384xf32> -> vector<16x384xf32>
    %4 = vector.shape_cast %3 : vector<16x384xf32> to vector<2x8x384xf32>
    %5 = vector.extract_strided_slice %4 {offsets = [0, 0, 0], sizes = [2, 8, 128], strides = [1, 1, 1]} : vector<2x8x384xf32> to vector<2x8x128xf32>
    %6 = vector.extract_strided_slice %4 {offsets = [0, 0, 128], sizes = [2, 8, 128], strides = [1, 1, 1]} : vector<2x8x384xf32> to vector<2x8x128xf32>
    %7 = vector.extract_strided_slice %4 {offsets = [0, 0, 256], sizes = [2, 8, 128], strides = [1, 1, 1]} : vector<2x8x384xf32> to vector<2x8x128xf32>
    "tpu.trace_start"() <{level = 10 : i32, message = "bqd,bkd->bqk"}> : () -> ()
    %cst_4 = arith.constant dense<0.000000e+00> : vector<2x8x8xf32>
    %8 = tpu.matmul %6, %5, %cst_4 {dimension_numbers = #tpu.dot_dimension_numbers<[2], [2], [1], [1], [0, 0, 0, 1, 1, 1], [0], [0]>} : vector<2x8x128xf32>, vector<2x8x128xf32>, vector<2x8x8xf32> -> vector<2x8x8xf32>
    "tpu.trace_stop"() : () -> ()
    %9 = tpu.iota {dimensions = array<i32: 0>} : vector<8x8xi32>
    %10 = tpu.iota {dimensions = array<i32: 1>} : vector<8x8xi32>
    %11 = arith.cmpi sge, %9, %10 : vector<8x8xi32>
    %12 = vector.shape_cast %11 : vector<8x8xi1> to vector<1x8x8xi1>
    %cst_5 = arith.constant -1.000000e+30 : f32
    %13 = vector.shape_cast %12 : vector<1x8x8xi1> to vector<1x8x8xi1>
    %14 = vector.broadcast %13 : vector<1x8x8xi1> to vector<2x8x8xi1>
    %15 = vector.broadcast %cst_5 : f32 to vector<2x8x8xf32>
    %16 = arith.select %14, %8, %15 : vector<2x8x8xi1>, vector<2x8x8xf32>
    %cst_6 = arith.constant dense<0xFF800000> : vector<2x8xf32>
    %17 = vector.multi_reduction <maximumf>, %16, %cst_6 [2] : vector<2x8x8xf32> to vector<2x8xf32>
    %18 = vector.shape_cast %17 : vector<2x8xf32> to vector<2x8x1xf32>
    %19 = vector.broadcast %18 : vector<2x8x1xf32> to vector<2x8x8xf32>
    %20 = arith.subf %16, %19 : vector<2x8x8xf32>
    %21 = math.exp %20 : vector<2x8x8xf32>
    %cst_7 = arith.constant dense<0.000000e+00> : vector<2x8xf32>
    %22 = vector.multi_reduction <add>, %21, %cst_7 [2] : vector<2x8x8xf32> to vector<2x8xf32>
    %23 = vector.shape_cast %22 : vector<2x8xf32> to vector<2x8x1xf32>
    %24 = tpu.reciprocal %23 {approx = true} : vector<2x8x1xf32> -> vector<2x8x1xf32>
    %25 = vector.broadcast %24 : vector<2x8x1xf32> to vector<2x8x8xf32>
    %26 = arith.mulf %21, %25 : vector<2x8x8xf32>
    "tpu.trace_start"() <{level = 10 : i32, message = "bqk,bkd->bqd"}> : () -> ()
    %cst_8 = arith.constant dense<0.000000e+00> : vector<2x8x128xf32>
    %27 = tpu.matmul %26, %7, %cst_8 {dimension_numbers = #tpu.dot_dimension_numbers<[2], [1], [1], [2], [0, 0, 0, 1, 1, 2], [0], [0]>} : vector<2x8x8xf32>, vector<2x8x128xf32>, vector<2x8x128xf32> -> vector<2x8x128xf32>
    "tpu.trace_stop"() : () -> ()
    %c0_9 = arith.constant 0 : index
    %c0_10 = arith.constant 0 : index
    %c0_11 = arith.constant 0 : index
    %28 = vector.load %arg3[%c0_9, %c0_10, %c0_11] : memref<2x8x128xf32, #tpu.memory_space<vmem>>, vector<2x8x128xf32>
    tpu.vector_store %arg3[%c0_9, %c0_10, %c0_11], %27 {strides = array<i32>} : memref<2x8x128xf32, #tpu.memory_space<vmem>>, vector<2x8x128xf32>,
    return
  }
  func.func @transform_0(%arg0: i32) -> (i32, i32, i32) {
    %c0_i32 = arith.constant 0 : i32
    %c0_i32_0 = arith.constant 0 : i32
    %c0_i32_1 = arith.constant 0 : i32
    return %arg0, %c0_i32, %c0_i32_0 : i32, i32, i32
  }
  func.func @transform_1(%arg0: i32) -> (i32, i32) {
    %c0_i32 = arith.constant 0 : i32
    %c0_i32_0 = arith.constant 0 : i32
    %c0_i32_1 = arith.constant 0 : i32
    return %c0_i32, %c0_i32_0 : i32, i32
  }
  func.func @transform_2(%arg0: i32) -> (i32, i32, i32) {
    %c0_i32 = arith.constant 0 : i32
    %c0_i32_0 = arith.constant 0 : i32
    %c0_i32_1 = arith.constant 0 : i32
    return %arg0, %c0_i32, %c0_i32_0 : i32, i32, i32
  }
}

</mosaic_0001>

<llo_original>
// kernel: tpu_custom_call.1
$region0: #{tpu_custom_call.1}
  #allocation0 [shape = 'u32[]', space=smem, size = 0x4, offset = 0x4, fixed_abs, tag = 'smem constant byte address 0x4 - core index']
  #allocation1 [shape = 'u32[72,128]{1,0:T(1,128)}', space=vmem, size = 0x9000, scoped, tag = 'internal scratch']
  %s0 = inlined_call_operand.hbm [shape: f32[2,8,32], index: 0, kind: input, shape index: {}]
  %s1 = inlined_call_operand.hbm [shape: f32[32,384], index: 1, kind: input, shape index: {}]
  %s2 = inlined_call_operand.hbm [shape: f32[2,8,128], index: 2, kind: output, shape index: {}]
  %s3 = sld [smem:[#allocation0]]
  $region26: #{tpu_custom_call.1} parent=0
    _
  %s5 = ssub.s32 1, %s3
  %s6 = scalar_select 0, %s5, %s3
  $region1: #{tpu_custom_call.1} parent=0
    #allocation2 [shape = 'u8[8192]{0}', space=vmem, size = 0x2000, scoped, tag = 'input window, operand 0, single buffered']
    #allocation3 [shape = 's32[1]{0}', space=sflag, size = 0x4, scoped, tag = 'scoped memory for tpu_custom_call.1']
    #allocation4 [shape = 's32[1]{0}', space=sflag, size = 0x4, scoped, tag = 'scoped memory for tpu_custom_call.1']
    #allocation5 [shape = 'u8[49152]{0}', space=vmem, size = 0xc000, scoped, tag = 'input window, operand 1, single buffered']
    #allocation6 [shape = 's32[1]{0}', space=sflag, size = 0x4, scoped, tag = 'scoped memory for tpu_custom_call.1']
    #allocation7 [shape = 'u8[8192]{0}', space=vmem, size = 0x2000, scoped, tag = 'output window, operand 0, single buffered']
    %7 = vsyncpa [#allocation3], 0
    %8 = vsyncpa [#allocation6], 0
    %9 = vsyncpa [#allocation4], 0
    // Predicated region
    $region2: #{tpu_custom_call.1} parent=1 // pred_check
      _
    $region3: #{tpu_custom_call.1} parent=1 // pred_check_branch
      %11 = sbr.rel (0) target = $region5
    $region4: #{tpu_custom_call.1} parent=1 // pred_region
      %13 = vsyncadd [#allocation3], 0
      %s14 = sshll.u32 %s0, 4
      %s15 = int_to_ptr.hbm [resolvable:$true] %s14
      %s16 = sshll.u32 [#allocation2], 4
      %s17 = int_to_ptr.vmem [resolvable:$true] %s16
      %22 = dma.hbm_to_vmem [thread:$0]  %s15, 256, %s17, [#allocation3], 128, 128, 8
    $region5: #{tpu_custom_call.1} parent=1 // pred_fallthru
      _
    // Predicated region
    $region6: #{tpu_custom_call.1} parent=1 // pred_check
      _
    $region7: #{tpu_custom_call.1} parent=1 // pred_check_branch
      %24 = sbr.rel (0) target = $region9
    $region8: #{tpu_custom_call.1} parent=1 // pred_region
      %26 = vsyncadd [#allocation6], 0
      %s27 = sshll.u32 %s1, 4
      %s28 = int_to_ptr.hbm [resolvable:$true] %s27
      %s29 = sshll.u32 [#allocation5], 4
      %s30 = int_to_ptr.vmem [resolvable:$true] %s29
      %35 = dma.hbm_to_vmem [thread:$0]  %s28, 1536, %s30, [#allocation6], 384, 384, 24
    $region9: #{tpu_custom_call.1} parent=1 // pred_fallthru
      _
    // Predicated region
    $region10: #{tpu_custom_call.1} parent=1 // pred_check
      _
    $region11: #{tpu_custom_call.1} parent=1 // pred_check_branch
      %37 = sbr.rel (0) target = $region13
    $region12: #{tpu_custom_call.1} parent=1 // pred_region
      %39 = dma.done [#allocation3], 256
    $region13: #{tpu_custom_call.1} parent=1 // pred_fallthru
      _
    // Predicated region
    $region14: #{tpu_custom_call.1} parent=1 // pred_check
      _
    $region15: #{tpu_custom_call.1} parent=1 // pred_check_branch
      %41 = sbr.rel (0) target = $region17
    $region16: #{tpu_custom_call.1} parent=1 // pred_region
      %43 = dma.done [#allocation6], 1536
    $region17: #{tpu_custom_call.1} parent=1 // pred_fallthru
      _
    %v44 = vld [vmem:[#allocation2] sm:$0xff]
    %v45 = vld [vmem:[#allocation2 + $0x8] sm:$0xff]
    %v46 = vld [vmem:[#allocation5] sm:$0xff]
    %v47 = vld [vmem:[#allocation5 + $0x8] sm:$0xff]
    %v48 = vld [vmem:[#allocation5 + $0x10] sm:$0xff]
    %v49 = vld [vmem:[#allocation5 + $0x18] sm:$0xff]
    %v50 = vld [vmem:[#allocation5 + $0x20] sm:$0xff]
    %v51 = vld [vmem:[#allocation5 + $0x28] sm:$0xff]
    %v52 = vld [vmem:[#allocation5 + $0x30] sm:$0xff]
    %v53 = vld [vmem:[#allocation5 + $0x38] sm:$0xff]
    %v54 = vld [vmem:[#allocation5 + $0x40] sm:$0xff]
    %v55 = vld [vmem:[#allocation5 + $0x48] sm:$0xff]
    %v56 = vld [vmem:[#allocation5 + $0x50] sm:$0xff]
    %v57 = vld [vmem:[#allocation5 + $0x58] sm:$0xff]
    %vm58 = vcmask 261120
    %v60 = vsel %vm58, %v44, 0
    %v63 = vsel %vm58, %v45, 0
    %65 = vmatpush.msra.mxu0 0.0
    %66 = vmatpush.msra.mxu0 0.0
    %67 = vmatpush.msra.mxu0 0.0
    %68 = vmatpush.msra.mxu0 0.0
    %69 = vmatpush.msra.mxu0 0.0
    %70 = vmatpush.msra.mxu0 0.0
    %71 = vmatpush.msra.mxu0 0.0
    %72 = vmatpush.msra.mxu0 0.0
    %73 = vmatpush.msra.mxu0 0.0
    %74 = vmatpush.msra.mxu0 0.0
    %75 = vmatpush.msra.mxu0 0.0
    %76 = vmatpush.msra.mxu0 0.0
    %77 = vmatpush.msra.mxu0 %v55
    %78 = vmatpush.msra.mxu0 %v52
    %79 = vmatpush.msra.mxu0 %v49
    %80 = vmatpush.msra.mxu0 %v46
    %81 = vmatmul.f32.gmra.mxu0 %v60
    %v82 = vpop.f32.mrf.mxu0
    %v83 = vadd.f32 0.0, %v82
    %84 = vmatmul.f32.gmra.mxu0 %v63
    %v85 = vpop.f32.mrf.mxu0
    %v86 = vadd.f32 0.0, %v85
    %87 = vdwg.mxu0
    %88 = vmatpush.msra.mxu0 0.0
    %89 = vmatpush.msra.mxu0 0.0
    %90 = vmatpush.msra.mxu0 0.0
    %91 = vmatpush.msra.mxu0 0.0
    %92 = vmatpush.msra.mxu0 0.0
    %93 = vmatpush.msra.mxu0 0.0
    %94 = vmatpush.msra.mxu0 0.0
    %95 = vmatpush.msra.mxu0 0.0
    %96 = vmatpush.msra.mxu0 0.0
    %97 = vmatpush.msra.mxu0 0.0
    %98 = vmatpush.msra.mxu0 0.0
    %99 = vmatpush.msra.mxu0 0.0
    %100 = vmatpush.msra.mxu0 %v56
    %101 = vmatpush.msra.mxu0 %v53
    %102 = vmatpush.msra.mxu0 %v50
    %103 = vmatpush.msra.mxu0 %v47
    %104 = vmatmul.f32.gmra.mxu0 %v60
    %v105 = vpop.f32.mrf.mxu0
    %v106 = vadd.f32 0.0, %v105
    %107 = vmatmul.f32.gmra.mxu0 %v63
    %v108 = vpop.f32.mrf.mxu0
    %v109 = vadd.f32 0.0, %v108
    %110 = vdwg.mxu0
    %111 = vmatpush.msra.mxu0 0.0
    %112 = vmatpush.msra.mxu0 0.0
    %113 = vmatpush.msra.mxu0 0.0
    %114 = vmatpush.msra.mxu0 0.0
    %115 = vmatpush.msra.mxu0 0.0
    %116 = vmatpush.msra.mxu0 0.0
    %117 = vmatpush.msra.mxu0 0.0
    %118 = vmatpush.msra.mxu0 0.0
    %119 = vmatpush.msra.mxu0 0.0
    %120 = vmatpush.msra.mxu0 0.0
    %121 = vmatpush.msra.mxu0 0.0
    %122 = vmatpush.msra.mxu0 0.0
    %123 = vmatpush.msra.mxu0 %v57
    %124 = vmatpush.msra.mxu0 %v54
    %125 = vmatpush.msra.mxu0 %v51
    %126 = vmatpush.msra.mxu0 %v48
    %127 = vmatmul.f32.gmra.mxu0 %v60
    %v128 = vpop.f32.mrf.mxu0
    %v129 = vadd.f32 0.0, %v128
    %130 = vmatmul.f32.gmra.mxu0 %v63
    %v131 = vpop.f32.mrf.mxu0
    %v132 = vadd.f32 0.0, %v131
    %133 = vdwg.mxu0
    %134 = vmatpush.xpose.msra.mxu0 0.0
    %135 = vmatpush.xpose.msra.mxu0 0.0
    %136 = vmatpush.xpose.msra.mxu0 0.0
    %137 = vmatpush.xpose.msra.mxu0 0.0
    %138 = vmatpush.xpose.msra.mxu0 0.0
    %139 = vmatpush.xpose.msra.mxu0 0.0
    %140 = vmatpush.xpose.msra.mxu0 0.0
    %141 = vmatpush.xpose.msra.mxu0 0.0
    %142 = vmatpush.xpose.msra.mxu0 0.0
    %143 = vmatpush.xpose.msra.mxu0 0.0
    %144 = vmatpush.xpose.msra.mxu0 0.0
    %145 = vmatpush.xpose.msra.mxu0 0.0
    %146 = vmatpush.xpose.msra.mxu0 0.0
    %147 = vmatpush.xpose.msra.mxu0 0.0
    %148 = vmatpush.xpose.msra.mxu0 0.0
    %149 = vmatpush.xpose.msra.mxu0 %v83
    %150 = vmatmul.f32.gmra.mxu0 %v106
    %v151 = vpop.f32.mrf.mxu0
    %v152 = vadd.f32 0.0, %v151
    %153 = vdwg.mxu0
    %154 = vmatpush.xpose.msra.mxu0 0.0
    %155 = vmatpush.xpose.msra.mxu0 0.0
    %156 = vmatpush.xpose.msra.mxu0 0.0
    %157 = vmatpush.xpose.msra.mxu0 0.0
    %158 = vmatpush.xpose.msra.mxu0 0.0
    %159 = vmatpush.xpose.msra.mxu0 0.0
    %160 = vmatpush.xpose.msra.mxu0 0.0
    %161 = vmatpush.xpose.msra.mxu0 0.0
    %162 = vmatpush.xpose.msra.mxu0 0.0
    %163 = vmatpush.xpose.msra.mxu0 0.0
    %164 = vmatpush.xpose.msra.mxu0 0.0
    %165 = vmatpush.xpose.msra.mxu0 0.0
    %166 = vmatpush.xpose.msra.mxu0 0.0
    %167 = vmatpush.xpose.msra.mxu0 0.0
    %168 = vmatpush.xpose.msra.mxu0 0.0
    %169 = vmatpush.xpose.msra.mxu0 %v86
    %170 = vmatmul.f32.gmra.mxu0 %v109
    %v171 = vpop.f32.mrf.mxu0
    %v172 = vadd.f32 0.0, %v171
    %173 = vdwg.mxu0
    %v174 = vlaneseq
    %v175 = vshrl.u32 %v174, 7
    %v176 = vlaneseq
    %v177 = vand.u32 %v176, 127
    %vm178 = vcmp.ge.s32.totalorder %v175, %v177
    %v179 = vsel %vm178, 1, 0
    %vm180 = vcmp.eq.s32.totalorder %v179, 1
    %v181 = vsel %vm180, %v152, -1e+30
    %v182 = vsel %vm180, %v172, -1e+30
    %vm183 = vcmask 64512
    %v184 = vsel %vm183, %v181, -inf
    %185 = vmax.xlane.f32.xlu0 %v184
    %v186 = vpop.xlane.xlu0 %185
    %v187 = vsel %vm183, %v182, -inf
    %188 = vmax.xlane.f32.xlu0 %v187
    %v189 = vpop.xlane.xlu0 %188
    %v190 = vsub.f32 %v181, %v186
    %v191 = vsub.f32 %v182, %v189
    %v192 = vmul.f32 %v190, 1.442695
    %v193 = vpow.pop %v192
    %v194 = vmul.f32 %v191, 1.442695
    %v195 = vpow.pop %v194
    %v196 = vsel %vm183, %v193, 0.0
    %197 = vadd.xlane.f32.xlu0 %v196
    %v198 = vpop.xlane.xlu0 %197
    %v199 = vsel %vm183, %v195, 0.0
    %200 = vadd.xlane.f32.xlu0 %v199
    %v201 = vpop.xlane.xlu0 %200
    %v202 = vrcp.pop %v198
    %v203 = vrcp.pop %v201
    %v204 = vmul.f32 %v193, %v202
    %v205 = vmul.f32 %v195, %v203
    %v207 = vsel %vm183, %v204, 0
    %209 = vmatpush.msra.mxu0 0.0
    %210 = vmatpush.msra.mxu0 0.0
    %211 = vmatpush.msra.mxu0 0.0
    %212 = vmatpush.msra.mxu0 0.0
    %213 = vmatpush.msra.mxu0 0.0
    %214 = vmatpush.msra.mxu0 0.0
    %215 = vmatpush.msra.mxu0 0.0
    %216 = vmatpush.msra.mxu0 0.0
    %217 = vmatpush.msra.mxu0 0.0
    %218 = vmatpush.msra.mxu0 0.0
    %219 = vmatpush.msra.mxu0 0.0
    %220 = vmatpush.msra.mxu0 0.0
    %221 = vmatpush.msra.mxu0 0.0
    %222 = vmatpush.msra.mxu0 0.0
    %223 = vmatpush.msra.mxu0 0.0
    %224 = vmatpush.msra.mxu0 %v129
    %225 = vmatmul.f32.gmra.mxu0 %v207
    %v226 = vpop.f32.mrf.mxu0
    %v227 = vadd.f32 0.0, %v226
    %228 = vdwg.mxu0
    %v230 = vsel %vm183, %v205, 0
    %232 = vmatpush.msra.mxu0 0.0
    %233 = vmatpush.msra.mxu0 0.0
    %234 = vmatpush.msra.mxu0 0.0
    %235 = vmatpush.msra.mxu0 0.0
    %236 = vmatpush.msra.mxu0 0.0
    %237 = vmatpush.msra.mxu0 0.0
    %238 = vmatpush.msra.mxu0 0.0
    %239 = vmatpush.msra.mxu0 0.0
    %240 = vmatpush.msra.mxu0 0.0
    %241 = vmatpush.msra.mxu0 0.0
    %242 = vmatpush.msra.mxu0 0.0
    %243 = vmatpush.msra.mxu0 0.0
    %244 = vmatpush.msra.mxu0 0.0
    %245 = vmatpush.msra.mxu0 0.0
    %246 = vmatpush.msra.mxu0 0.0
    %247 = vmatpush.msra.mxu0 %v132
    %248 = vmatmul.f32.gmra.mxu0 %v230
    %v249 = vpop.f32.mrf.mxu0
    %v250 = vadd.f32 0.0, %v249
    %251 = vdwg.mxu0
    %252 = vst [vmem:[#allocation7] sm:$0xff] %v227
    %253 = vst [vmem:[#allocation7 + $0x8] sm:$0xff] %v250
    // Predicated region
    $region18: #{tpu_custom_call.1} parent=1 // pred_check
      _
    $region19: #{tpu_custom_call.1} parent=1 // pred_check_branch
      %255 = sbr.rel (0) target = $region21
    $region20: #{tpu_custom_call.1} parent=1 // pred_region
      %257 = vsyncadd [#allocation4], 0
      %s258 = sshll.u32 [#allocation7], 4
      %s259 = int_to_ptr.vmem [resolvable:$true] %s258
      %s260 = sshll.u32 %s2, 4
      %s261 = int_to_ptr.hbm [resolvable:$true] %s260
      %266 = dma.vmem_to_hbm [thread:$0]  %s259, 256, %s261, [#allocation4], 128, 128, 8
    $region21: #{tpu_custom_call.1} parent=1 // pred_fallthru
      _
    // Predicated region
    $region22: #{tpu_custom_call.1} parent=1 // pred_check
      _
    $region23: #{tpu_custom_call.1} parent=1 // pred_check_branch
      %268 = sbr.rel (0) target = $region25
    $region24: #{tpu_custom_call.1} parent=1 // pred_region
      %270 = dma.done [#allocation4], 256
    $region25: #{tpu_custom_call.1} parent=1 // pred_fallthru
      _
    %271 = vsyncpa [#allocation3], 1
    %272 = vsyncpa [#allocation6], 1
    %273 = vsyncpa [#allocation4], 1

</llo_original>
